<compile_context>
chip_gen: v5e
topology: v5e:2x2
jax: 0.10.0
libtpu: 0.0.40
codegen_flags: <defaults>
</compile_context>

<pallas_src>
import numpy as np
import jax
import jax.numpy as jnp
from jax import lax
from jax.experimental import pallas as pl
from jax.experimental.pallas import tpu as pltpu

EPS = 1e-5  # PyTorch BatchNorm3d default eps


# ----------------------------------------------------------------------------
# wrapper-side helpers
# ----------------------------------------------------------------------------
def _choose_tm(m, row_bytes, cap=2048, budget=32 * 1024 * 1024):
    tm = max(8, min(cap, ((m + 7) // 8) * 8))
    max_rows = budget // max(1, 4 * row_bytes)          # ~2x double-buffered in+out
    if max_rows >= 8:
        tm = min(tm, (max_rows // 8) * 8)
    return int(max(8, tm))


def _pad_rows(x2d, tm):
    m = x2d.shape[0]
    mp = ((m + tm - 1) // tm) * tm
    if mp != m:
        x2d = jnp.pad(x2d, ((0, mp - m), (0, 0)))
    return x2d


def _bn_scale_shift(stats, gamma, beta, count):
    # stats: (2, C) = [sum, sum of squares] over N*D*H*W voxels (training-mode BN)
    mean = stats[0] / count
    var = jnp.maximum(stats[1] / count - mean * mean, 0.0)  # biased variance
    scale = (gamma.astype(jnp.float32) / jnp.sqrt(var + EPS))
    shift = beta.astype(jnp.float32) - mean * scale
    return scale.reshape(1, -1), shift.reshape(1, -1)


# ----------------------------------------------------------------------------
# Kernel 1: ConvTranspose3d(kernel=2, stride=2) as ONE fused matmul.
# out[n,2d+kd,2h+kh,2w+kw,co] = x[n,d,h,w,:] @ W[:, kd,kh,kw, co] + b[co]
# => (M, cin) @ (cin, 8*cout), row-tiled, parallel grid.
# ----------------------------------------------------------------------------
def _matmul_bias_kernel(x_ref, w_ref, b_ref, o_ref):
    o_ref[...] = (jnp.dot(x_ref[...], w_ref[...],
                          preferred_element_type=jnp.float32)
                  + b_ref[...]).astype(o_ref.dtype)


def deconv2x2x2(x, w_torch, bias, cap=2048):
    # x: (N, D, H, W, Cin) channels-last; w_torch: (Cin, Cout, 2, 2, 2)
    N, D, H, W, cin = x.shape
    cout = int(w_torch.shape[1])
    w = jnp.transpose(w_torch, (0, 2, 3, 4, 1)).reshape(cin, 8 * cout).astype(x.dtype)
    b = jnp.tile(bias.astype(jnp.float32), 8).reshape(1, 8 * cout)

    m = N * D * H * W
    row_bytes = (cin + 8 * cout) * x.dtype.itemsize
    tm = _choose_tm(m, row_bytes, cap)
    x2d = _pad_rows(x.reshape(m, cin), tm)
    mp = x2d.shape[0]

    y = pl.pallas_call(
        _matmul_bias_kernel,
        out_shape=jax.ShapeDtypeStruct((mp, 8 * cout), x.dtype),
        grid=(mp // tm,),
        in_specs=[pl.BlockSpec((tm, cin), lambda i: (i, 0)),
                  pl.BlockSpec((cin, 8 * cout), lambda i: (0, 0)),
                  pl.BlockSpec((1, 8 * cout), lambda i: (0, 0))],
        out_specs=pl.BlockSpec((tm, 8 * cout), lambda i: (i, 0)),
        compiler_params=pltpu.CompilerParams(
            dimension_semantics=("parallel",)),
    )(x2d, w, b)

    y = y[:m].reshape(N, D, H, W, 2, 2, 2, cout)
    # TODO(synk): fold this (2,2,2) interleave into the consumer conv's input
    # gather to remove one full-tensor HBM transpose pass.
    y = y.transpose(0, 1, 4, 2, 5, 3, 6, 7).reshape(N, 2 * D, 2 * H, 2 * W, cout)
    return y


# ----------------------------------------------------------------------------
# Kernel 2: Conv3d 3x3x3 (pad=1) over one or two channel streams (split-K),
# with optional fused (BN-apply + ReLU) on the input and fused per-channel
# BatchNorm statistics as a second accumulated output.
#
# Grid (N, D): one output depth-plane per step.  Inputs live in HBM
# (memory_space=pl.ANY); depth planes are streamed through a 4-slot rolling
# VMEM buffer via manual async copies, so each plane is DMA'd exactly once.
# H/W halos are built in-kernel (zero pad); the D halo uses boundary masking.
# ----------------------------------------------------------------------------
def _pad_hw(p):
    # zero-pad a (H, W, C) plane to (H+2, W+2, C)
    H, W, C = p.shape
    zr = jnp.zeros((1, W, C), p.dtype)
    p = jnp.concatenate([zr, p, zr], axis=0)
    zc = jnp.zeros((H + 2, 1, C), p.dtype)
    return jnp.concatenate([zc, p, zc], axis=1)


def _make_conv3x3x3_kernel(cins, cout, H, W, D, apply_act, nbuf):
    n_streams = len(cins)

    def kernel(*refs):
        i = 0
        b_ref = refs[i]; i += 1
        w_refs = refs[i:i + n_streams]; i += n_streams
        if apply_act:
            scale_ref, shift_ref = refs[i], refs[i + 1]
            i += 2
        x_hbms = refs[i:i + n_streams]; i += n_streams
        y_ref = refs[i]; s_ref = refs[i + 1]; i += 2
        bufs = refs[i:i + n_streams]; i += n_streams
        sems = refs[i]

        n = pl.program_id(0)
        d = pl.program_id(1)

        def start_fetch(p, slot):
            for s in range(n_streams):
                pltpu.make_async_copy(x_hbms[s].at[n, p],
                                      bufs[s].at[slot],
                                      sems.at[s, slot]).start()

        def wait_fetch(p, slot):
            for s in range(n_streams):
                pltpu.make_async_copy(x_hbms[s].at[n, p],
                                      bufs[s].at[slot],
                                      sems.at[s, slot]).wait()

        # -- rolling-buffer schedule: each depth plane fetched from HBM once --
        @pl.when(d == 0)
        def _prime():
            for p in range(min(3, D)):
                start_fetch(p, p % nbuf)
            wait_fetch(0, 0)
            if D > 1:
                wait_fetch(1, 1)

        if D > 3:
            @pl.when(jnp.logical_and(d > 0, d + 2 < D))
            def _prefetch():
                start_fetch(d + 2, (d + 2) % nbuf)

        if D > 2:
            @pl.when(jnp.logical_and(d > 0, d + 1 < D))
            def _wait_next():
                wait_fetch(d + 1, (d + 1) % nbuf)

        # -- 3x3x3 conv on planes (d-1, d, d+1), zero D-halo via masking --
        lo_p = jnp.maximum(d - 1, 0)
        hi_p = jnp.minimum(d + 1, D - 1)
        lo_m = jnp.where(d > 0, 1.0, 0.0).astype(jnp.float32)
        hi_m = jnp.where(d < D - 1, 1.0, 0.0).astype(jnp.float32)
        plane_ids = (lo_p, d, hi_p)
        plane_masks = (lo_m, None, hi_m)

        acc = jnp.zeros((H * W, cout), jnp.float32)
        for s in range(n_streams):
            cin_s = cins[s]
            for kd in range(3):
                slot = plane_ids[kd] % nbuf
                plane = bufs[s][slot]                       # (H, W, cin_s)
                if apply_act:
                    plane = jnp.maximum(
                        plane.astype(jnp.float32) * scale_ref[...]
                        + shift_ref[...], 0.0).astype(bufs[s].dtype)
                padded = _pad_hw(plane)                     # (H+2, W+2, cin_s)
                part = jnp.zeros((H * W, cout), jnp.float32)
                for kh in range(3):
                    for kw in range(3):
                        xt = padded[kh:kh + H, kw:kw + W, :].reshape(H * W, cin_s)
                        wt = w_refs[s][kd, kh, kw]          # (cin_s, cout)
                        part = part + jnp.dot(
                            xt, wt, preferred_element_type=jnp.float32)
                if plane_masks[kd] is None:
                    acc = acc + part
                else:
                    acc = acc + plane_masks[kd] * part

        acc = acc + b_ref[...]
        y_ref[0, 0] = acc.astype(y_ref.dtype)

        # fused BatchNorm statistics (accumulated across the inner d axis)
        @pl.when(d == 0)
        def _init_stats():
            s_ref[...] = jnp.zeros_like(s_ref)

        s_ref[0, 0:1, :] += jnp.sum(acc, axis=0, keepdims=True)
        s_ref[0, 1:2, :] += jnp.sum(acc * acc, axis=0, keepdims=True)

    return kernel


def conv3x3x3_fused(streams, w_torch, bias, scale=None, shift=None, nbuf=4):
    # streams: list of (N, D, H, W, cin_s) arrays (same spatial dims).
    # w_torch: (Cout, sum(cin_s), 3, 3, 3) (PyTorch layout).
    N, D, H, W = streams[0].shape[:4]
    cins = tuple(int(s.shape[-1]) for s in streams)
    cout = int(w_torch.shape[0])
    apply_act = scale is not None
    assert not apply_act or len(streams) == 1
    assert sum(cins) == int(w_torch.shape[1])
    dtype = streams[0].dtype

    w_full = jnp.transpose(w_torch, (2, 3, 4, 1, 0)).astype(dtype)  # (3,3,3,cin_tot,cout)
    ws, off = [], 0
    for c in cins:
        ws.append(w_full[:, :, :, off:off + c, :])
        off += c
    b = bias.reshape(1, cout).astype(jnp.float32)

    in_specs = [pl.BlockSpec((1, cout), lambda n, d: (0, 0))]
    args = [b]
    for w_s, c in zip(ws, cins):
        in_specs.append(pl.BlockSpec((3, 3, 3, c, cout),
                                     lambda n, d: (0, 0, 0, 0, 0)))
        args.append(w_s)
    if apply_act:
        cin0 = cins[0]
        in_specs += [pl.BlockSpec((1, cin0), lambda n, d: (0, 0)),
                     pl.BlockSpec((1, cin0), lambda n, d: (0, 0))]
        args += [scale.reshape(1, cin0).astype(jnp.float32),
                 shift.reshape(1, cin0).astype(jnp.float32)]
    for s_arr in streams:
        in_specs.append(pl.BlockSpec(memory_space=pl.ANY))
        args.append(s_arr)

    out_shape = (jax.ShapeDtypeStruct((N, D, H * W, cout), dtype),
                 jax.ShapeDtypeStruct((N, 2, cout), jnp.float32))
    out_specs = (pl.BlockSpec((1, 1, H * W, cout), lambda n, d: (n, d, 0, 0)),
                 pl.BlockSpec((1, 2, cout), lambda n, d: (n, 0, 0)))
    scratch = [pltpu.VMEM((nbuf, H, W, c), dtype) for c in cins]
    scratch.append(pltpu.SemaphoreType.DMA((len(cins), nbuf)))

    y, s = pl.pallas_call(
        _make_conv3x3x3_kernel(cins, cout, H, W, D, apply_act, nbuf),
        out_shape=out_shape,
        grid=(N, D),
        in_specs=in_specs,
        out_specs=out_specs,
        scratch_shapes=scratch,
        compiler_params=pltpu.CompilerParams(
            dimension_semantics=("parallel", "arbitrary"),
            vmem_limit_bytes=64 * 1024 * 1024),
    )(*args)

    stats = s.sum(axis=0)                     # (2, cout)
    return y.reshape(N, D, H, W, cout), stats


# ----------------------------------------------------------------------------
# Kernel 3: standalone fused BN-apply + ReLU (last_layer=False branch).
# ----------------------------------------------------------------------------
def _bn_relu_rows_kernel(x_ref, scale_ref, shift_ref, o_ref):
    o_ref[...] = jnp.maximum(
        x_ref[...].astype(jnp.float32) * scale_ref[...] + shift_ref[...],
        0.0).astype(o_ref.dtype)


def bn_relu(x, scale, shift, cap=2048):
    shape = x.shape
    C = shape[-1]
    m = int(np.prod(shape[:-1]))
    tm = _choose_tm(m, 2 * C * x.dtype.itemsize, cap)
    x2d = _pad_rows(x.reshape(m, C), tm)
    mp = x2d.shape[0]
    y = pl.pallas_call(
        _bn_relu_rows_kernel,
        out_shape=jax.ShapeDtypeStruct((mp, C), x.dtype),
        grid=(mp // tm,),
        in_specs=[pl.BlockSpec((tm, C), lambda i: (i, 0)),
                  pl.BlockSpec((1, C), lambda i: (0, 0)),
                  pl.BlockSpec((1, C), lambda i: (0, 0))],
        out_specs=pl.BlockSpec((tm, C), lambda i: (i, 0)),
        compiler_params=pltpu.CompilerParams(
            dimension_semantics=("parallel",)),
    )(x2d, scale, shift)
    return y[:m].reshape(shape)


# ----------------------------------------------------------------------------
# Kernel 4: fused (BN-apply + ReLU) -> Conv3d 1x1x1 (last layer), row-tiled.
# ----------------------------------------------------------------------------
def _act_matmul_bias_kernel(x_ref, scale_ref, shift_ref, w_ref, b_ref, o_ref):
    xa = jnp.maximum(
        x_ref[...].astype(jnp.float32) * scale_ref[...] + shift_ref[...], 0.0)
    o_ref[...] = (jnp.dot(xa, w_ref[...], preferred_element_type=jnp.float32)
                  + b_ref[...]).astype(o_ref.dtype)


def act_conv1x1(x, scale, shift, w_torch, bias, cap=2048):
    N, D, H, W, cin = x.shape
    cout = int(w_torch.shape[0])
    w = w_torch.reshape(cout, cin).T.astype(jnp.float32)
    b = bias.reshape(1, cout).astype(jnp.float32)
    m = N * D * H * W
    tm = _choose_tm(m, (cin + cout) * 4, cap)
    x2d = _pad_rows(x.reshape(m, cin), tm)
    mp = x2d.shape[0]
    y = pl.pallas_call(
        _act_matmul_bias_kernel,
        out_shape=jax.ShapeDtypeStruct((mp, cout), x.dtype),
        grid=(mp // tm,),
        in_specs=[pl.BlockSpec((tm, cin), lambda i: (i, 0)),
                  pl.BlockSpec((1, cin), lambda i: (0, 0)),
                  pl.BlockSpec((1, cin), lambda i: (0, 0)),
                  pl.BlockSpec((cin, cout), lambda i: (0, 0)),
                  pl.BlockSpec((1, cout), lambda i: (0, 0))],
        out_specs=pl.BlockSpec((tm, cout), lambda i: (i, 0)),
        compiler_params=pltpu.CompilerParams(
            dimension_semantics=("parallel",)),
    )(x2d, scale, shift, w, b)
    return y[:m].reshape(N, D, H, W, cout)


# ----------------------------------------------------------------------------
# Full UpConv3DBlock forward.
# ----------------------------------------------------------------------------
def upconv3d_block(params, x, residual=None, last_layer=True):
    # x: (N, Cin, D, H, W) -- PyTorch NCDHW
    x = jnp.transpose(x, (0, 2, 3, 4, 1))  # -> NDHWC
    up = deconv2x2x2(x, params["upconv_w"], params["upconv_b"])

    streams = [up]
    if residual is not None:
        # residual is NOT concatenated in HBM: it is a second split-K stream.
        streams.append(jnp.transpose(residual, (0, 2, 3, 4, 1)))

    N, D2, H2, W2, _ = up.shape
    cnt = float(N * D2 * H2 * W2)

    # conv1 (+ residual split-K + fused BN statistics); unpadded input, halos
    # handled in-kernel.
    y1, stats1 = conv3x3x3_fused(streams, params["conv1_w"], params["conv1_b"])
    scale1, shift1 = _bn_scale_shift(stats1, params["bn_gamma"],
                                     params["bn_beta"], cnt)

    # conv2 with BN1-apply + ReLU fused into its input path (no materialized
    # activated / padded intermediate).
    y2, stats2 = conv3x3x3_fused([y1], params["conv2_w"], params["conv2_b"],
                                 scale=scale1, shift=shift1)
    scale2, shift2 = _bn_scale_shift(stats2, params["bn_gamma"],
                                     params["bn_beta"], cnt)

    if last_layer:
        out = act_conv1x1(y2, scale2, shift2,
                          params["conv3_w"], params["conv3_b"])  # BN+ReLU fused
    else:
        out = bn_relu(y2, scale2, shift2)

    return jnp.transpose(out, (0, 4, 1, 2, 3))  # back to NCDHW


# ----------------------------------------------------------------------------
# Pure-XLA reference (independent of the Pallas path) for verification.
# ----------------------------------------------------------------------------
def reference_upconv3d_block(params, x, residual=None, last_layer=True):
    dn = ("NCDHW", "OIDHW", "NCDHW")
    prec = jax.lax.Precision.HIGHEST
    wt = params["upconv_w"]
    w_flip = jnp.transpose(jnp.flip(wt, axis=(2, 3, 4)), (1, 0, 2, 3, 4))
    y = lax.conv_general_dilated(x, w_flip, window_strides=(1, 1, 1),
                                 padding=[(1, 1)] * 3, lhs_dilation=(2, 2, 2),
                                 dimension_numbers=dn, precision=prec)
    y = y + params["upconv_b"][None, :, None, None, None]
    if residual is not None:
        y = jnp.concatenate([y, residual], axis=1)

    def conv3(z, w, b):
        z = lax.conv_general_dilated(z, w, (1, 1, 1), [(1, 1)] * 3,
                                     dimension_numbers=dn, precision=prec)
        return z + b[None, :, None, None, None]

    def bnrelu(z, gamma, beta):
        mean = z.mean(axis=(0, 2, 3, 4), keepdims=True)
        var = z.var(axis=(0, 2, 3, 4), keepdims=True)
        zn = (z - mean) / jnp.sqrt(var + EPS)
        zn = zn * gamma[None, :, None, None, None] + beta[None, :, None, None, None]
        return jnp.maximum(zn, 0.0)

    y = bnrelu(conv3(y, params["conv1_w"], params["conv1_b"]),
               params["bn_gamma"], params["bn_beta"])
    y = bnrelu(conv3(y, params["conv2_w"], params["conv2_b"]),
               params["bn_gamma"], params["bn_beta"])
    if last_layer:
        y = lax.conv_general_dilated(y, params["conv3_w"], (1, 1, 1),
                                     [(0, 0)] * 3, dimension_numbers=dn,
                                     precision=prec)
        y = y + params["conv3_b"][None, :, None, None, None]
    return y


if __name__ == "__main__":
    key = jax.random.PRNGKey(0)
    ks = jax.random.split(key, 12)

    # UpConv3DBlock(in_channels=8, res_channels=4, last_layer=True, out_channels=3)
    N, Cin, D, H, W = 2, 8, 4, 4, 4
    res_ch, out_ch = 4, 3
    cmid = Cin // 2

    params = {
        "upconv_w": 0.2 * jax.random.normal(ks[0], (Cin, Cin, 2, 2, 2), jnp.float32),
        "upconv_b": 0.1 * jax.random.normal(ks[1], (Cin,), jnp.float32),
        "conv1_w": 0.2 * jax.random.normal(ks[2], (cmid, Cin + res_ch, 3, 3, 3), jnp.float32),
        "conv1_b": 0.1 * jax.random.normal(ks[3], (cmid,), jnp.float32),
        "conv2_w": 0.2 * jax.random.normal(ks[4], (cmid, cmid, 3, 3, 3), jnp.float32),
        "conv2_b": 0.1 * jax.random.normal(ks[5], (cmid,), jnp.float32),
        "bn_gamma": 1.0 + 0.1 * jax.random.normal(ks[6], (cmid,), jnp.float32),
        "bn_beta": 0.1 * jax.random.normal(ks[7], (cmid,), jnp.float32),
        "conv3_w": 0.2 * jax.random.normal(ks[8], (out_ch, cmid, 1, 1, 1), jnp.float32),
        "conv3_b": 0.1 * jax.random.normal(ks[9], (out_ch,), jnp.float32),
    }

    x = jax.random.normal(ks[10], (N, Cin, D, H, W), jnp.float32)
    residual = jax.random.normal(ks[11], (N, res_ch, 2 * D, 2 * H, 2 * W), jnp.float32)

    out = jax.block_until_ready(upconv3d_block(params, x, residual, last_layer=True))
    ref = jax.block_until_ready(reference_upconv3d_block(params, x, residual, last_layer=True))

    assert out.shape == (N, out_ch, 2 * D, 2 * H, 2 * W), out.shape
    # default (bf16-pass) MXU precision vs. HIGHEST-precision XLA reference
    np.testing.assert_allclose(np.asarray(out), np.asarray(ref), rtol=2e-2, atol=2e-2)
    print("KERNEL_OK")
</pallas_src>

<mosaic_0001>
module attributes {stable_mosaic.version = 11 : i64} {
  func.func @_matmul_bias_kernel(%arg0: i32, %arg1: memref<128x8xf32, #tpu.memory_space<vmem>>, %arg2: memref<8x64xf32, #tpu.memory_space<vmem>>, %arg3: memref<1x64xf32, #tpu.memory_space<vmem>>, %arg4: memref<128x64xf32, #tpu.memory_space<vmem>>) attributes {dimension_semantics = [#tpu.dimension_semantics<parallel>], iteration_bounds = array<i64: 1>, scalar_prefetch = 0 : i64, scratch_operands = 0 : i64, tpu.core_type = #tpu.core_type<tc>, window_params = [{transform_indices = @transform_0, window_bounds = array<i64: 128, 8>}, {pipeline_mode = #tpu.pipeline_mode<synchronous>, transform_indices = @transform_1, window_bounds = array<i64: 8, 64>}, {pipeline_mode = #tpu.pipeline_mode<synchronous>, transform_indices = @transform_2, window_bounds = array<i64: 1, 64>}, {transform_indices = @transform_3, window_bounds = array<i64: 128, 64>}]} {
    %c0 = arith.constant 0 : index
    %c0_0 = arith.constant 0 : index
    %0 = vector.load %arg1[%c0, %c0_0] : memref<128x8xf32, #tpu.memory_space<vmem>>, vector<128x8xf32>
    %c0_1 = arith.constant 0 : index
    %c0_2 = arith.constant 0 : index
    %1 = vector.load %arg2[%c0_1, %c0_2] : memref<8x64xf32, #tpu.memory_space<vmem>>, vector<8x64xf32>
    %cst = arith.constant dense<0.000000e+00> : vector<128x64xf32>
    %2 = tpu.matmul %0, %1, %cst {dimension_numbers = #tpu.dot_dimension_numbers<[1], [0], [0], [1], [0, 0, 1, 1], [], []>} : vector<128x8xf32>, vector<8x64xf32>, vector<128x64xf32> -> vector<128x64xf32>
    %c0_3 = arith.constant 0 : index
    %c0_4 = arith.constant 0 : index
    %3 = vector.load %arg3[%c0_3, %c0_4] : memref<1x64xf32, #tpu.memory_space<vmem>>, vector<1x64xf32>
    %4 = vector.broadcast %3 : vector<1x64xf32> to vector<128x64xf32>
    %5 = arith.addf %2, %4 : vector<128x64xf32>
    %c0_5 = arith.constant 0 : index
    %c0_6 = arith.constant 0 : index
    %6 = vector.load %arg4[%c0_5, %c0_6] : memref<128x64xf32, #tpu.memory_space<vmem>>, vector<128x64xf32>
    tpu.vector_store %arg4[%c0_5, %c0_6], %5 {strides = array<i32>} : memref<128x64xf32, #tpu.memory_space<vmem>>, vector<128x64xf32>,
    return
  }
  func.func @transform_0(%arg0: i32) -> (i32, i32) {
    %c0_i32 = arith.constant 0 : i32
    %c0_i32_0 = arith.constant 0 : i32
    return %arg0, %c0_i32 : i32, i32
  }
  func.func @transform_1(%arg0: i32) -> (i32, i32) {
    %c0_i32 = arith.constant 0 : i32
    %c0_i32_0 = arith.constant 0 : i32
    %c0_i32_1 = arith.constant 0 : i32
    return %c0_i32, %c0_i32_0 : i32, i32
  }
  func.func @transform_2(%arg0: i32) -> (i32, i32) {
    %c0_i32 = arith.constant 0 : i32
    %c0_i32_0 = arith.constant 0 : i32
    %c0_i32_1 = arith.constant 0 : i32
    return %c0_i32, %c0_i32_0 : i32, i32
  }
  func.func @transform_3(%arg0: i32) -> (i32, i32) {
    %c0_i32 = arith.constant 0 : i32
    %c0_i32_0 = arith.constant 0 : i32
    return %arg0, %c0_i32 : i32, i32
  }
}

</mosaic_0001>

<llo_original>
// kernel: tpu_custom_call.1
$region0: #{tpu_custom_call.1}
  #allocation0 [shape = 'u32[]', space=smem, size = 0x4, offset = 0x4, fixed_abs, tag = 'smem constant byte address 0x4 - core index']
  #allocation1 [shape = 'u32[72,128]{1,0:T(1,128)}', space=vmem, size = 0x9000, scoped, tag = 'internal scratch']
  %s0 = inlined_call_operand.vmem [shape: f32[128,8], index: 0, kind: input, shape index: {}]
  %s1 = inlined_call_operand.vmem [shape: f32[8,64], index: 1, kind: input, shape index: {}]
  %s2 = inlined_call_operand.vmem [shape: f32[1,64], index: 2, kind: input, shape index: {}]
  %s3 = inlined_call_operand.vmem [shape: f32[128,64], index: 3, kind: output, shape index: {}]
  %s4 = sld [smem:[#allocation0]]
  $region22: #{tpu_custom_call.1} parent=0
    _
  %s6 = ssub.s32 1, %s4
  %s7 = scalar_select 0, %s6, %s4
  // Predicated region
  $region2: #{tpu_custom_call.1} parent=0 // pred_check
    _
  $region3: #{tpu_custom_call.1} parent=0 // pred_check_branch
    %9 = sbr.rel (0) target = $region5
  $region4: #{tpu_custom_call.1} parent=0 // pred_region
    _
  $region5: #{tpu_custom_call.1} parent=0 // pred_fallthru
    _
  // Predicated region
  $region6: #{tpu_custom_call.1} parent=0 // pred_check
    _
  $region7: #{tpu_custom_call.1} parent=0 // pred_check_branch
    %11 = sbr.rel (0) target = $region9
  $region8: #{tpu_custom_call.1} parent=0 // pred_region
    _
  $region9: #{tpu_custom_call.1} parent=0 // pred_fallthru
    _
  // Predicated region
  $region10: #{tpu_custom_call.1} parent=0 // pred_check
    _
  $region11: #{tpu_custom_call.1} parent=0 // pred_check_branch
    %13 = sbr.rel (0) target = $region13
  $region12: #{tpu_custom_call.1} parent=0 // pred_region
    _
  $region13: #{tpu_custom_call.1} parent=0 // pred_fallthru
    _
  %v14 = vld [vmem:[%s0] sm:$0xff]
  %v15 = vld [vmem:[%s0 + $0x8] sm:$0xff]
  %v16 = vld [vmem:[%s0 + $0x10] sm:$0xff]
  %v17 = vld [vmem:[%s0 + $0x18] sm:$0xff]
  %v18 = vld [vmem:[%s0 + $0x20] sm:$0xff]
  %v19 = vld [vmem:[%s0 + $0x28] sm:$0xff]
  %v20 = vld [vmem:[%s0 + $0x30] sm:$0xff]
  %v21 = vld [vmem:[%s0 + $0x38] sm:$0xff]
  %v22 = vld [vmem:[%s0 + $0x40] sm:$0xff]
  %v23 = vld [vmem:[%s0 + $0x48] sm:$0xff]
  %v24 = vld [vmem:[%s0 + $0x50] sm:$0xff]
  %v25 = vld [vmem:[%s0 + $0x58] sm:$0xff]
  %v26 = vld [vmem:[%s0 + $0x60] sm:$0xff]
  %v27 = vld [vmem:[%s0 + $0x68] sm:$0xff]
  %v28 = vld [vmem:[%s0 + $0x70] sm:$0xff]
  %v29 = vld [vmem:[%s0 + $0x78] sm:$0xff]
  %v30 = vld [vmem:[%s1] sm:$0xff]
  %v31 = vld [vmem:[%s2] sm:$0x1]
  %v33 = vperm.slane %v31, 0
  %vm35 = vcmask 64512
  %v37 = vsel %vm35, %v14, 0
  %v40 = vsel %vm35, %v15, 0
  %v43 = vsel %vm35, %v16, 0
  %v46 = vsel %vm35, %v17, 0
  %v49 = vsel %vm35, %v18, 0
  %v52 = vsel %vm35, %v19, 0
  %v55 = vsel %vm35, %v20, 0
  %v58 = vsel %vm35, %v21, 0
  %v61 = vsel %vm35, %v22, 0
  %v64 = vsel %vm35, %v23, 0
  %v67 = vsel %vm35, %v24, 0
  %v70 = vsel %vm35, %v25, 0
  %v73 = vsel %vm35, %v26, 0
  %v76 = vsel %vm35, %v27, 0
  %v79 = vsel %vm35, %v28, 0
  %v82 = vsel %vm35, %v29, 0
  %84 = vmatpush.msra.mxu0 0.0
  %85 = vmatpush.msra.mxu0 0.0
  %86 = vmatpush.msra.mxu0 0.0
  %87 = vmatpush.msra.mxu0 0.0
  %88 = vmatpush.msra.mxu0 0.0
  %89 = vmatpush.msra.mxu0 0.0
  %90 = vmatpush.msra.mxu0 0.0
  %91 = vmatpush.msra.mxu0 0.0
  %92 = vmatpush.msra.mxu0 0.0
  %93 = vmatpush.msra.mxu0 0.0
  %94 = vmatpush.msra.mxu0 0.0
  %95 = vmatpush.msra.mxu0 0.0
  %96 = vmatpush.msra.mxu0 0.0
  %97 = vmatpush.msra.mxu0 0.0
  %98 = vmatpush.msra.mxu0 0.0
  %99 = vmatpush.msra.mxu0 %v30
  %100 = vmatmul.f32.gmra.mxu0 %v37
  %v101 = vpop.f32.mrf.mxu0
  %v102 = vadd.f32 %v33, %v101
  %103 = vmatmul.f32.gmra.mxu0 %v40
  %v104 = vpop.f32.mrf.mxu0
  %v105 = vadd.f32 %v33, %v104
  %106 = vmatmul.f32.gmra.mxu0 %v43
  %v107 = vpop.f32.mrf.mxu0
  %v108 = vadd.f32 %v33, %v107
  %109 = vmatmul.f32.gmra.mxu0 %v46
  %v110 = vpop.f32.mrf.mxu0
  %v111 = vadd.f32 %v33, %v110
  %112 = vmatmul.f32.gmra.mxu0 %v49
  %v113 = vpop.f32.mrf.mxu0
  %v114 = vadd.f32 %v33, %v113
  %115 = vmatmul.f32.gmra.mxu0 %v52
  %v116 = vpop.f32.mrf.mxu0
  %v117 = vadd.f32 %v33, %v116
  %118 = vmatmul.f32.gmra.mxu0 %v55
  %v119 = vpop.f32.mrf.mxu0
  %v120 = vadd.f32 %v33, %v119
  %121 = vmatmul.f32.gmra.mxu0 %v58
  %v122 = vpop.f32.mrf.mxu0
  %v123 = vadd.f32 %v33, %v122
  %124 = vmatmul.f32.gmra.mxu0 %v61
  %v125 = vpop.f32.mrf.mxu0
  %v126 = vadd.f32 %v33, %v125
  %127 = vmatmul.f32.gmra.mxu0 %v64
  %v128 = vpop.f32.mrf.mxu0
  %v129 = vadd.f32 %v33, %v128
  %130 = vmatmul.f32.gmra.mxu0 %v67
  %v131 = vpop.f32.mrf.mxu0
  %v132 = vadd.f32 %v33, %v131
  %133 = vmatmul.f32.gmra.mxu0 %v70
  %v134 = vpop.f32.mrf.mxu0
  %v135 = vadd.f32 %v33, %v134
  %136 = vmatmul.f32.gmra.mxu0 %v73
  %v137 = vpop.f32.mrf.mxu0
  %v138 = vadd.f32 %v33, %v137
  %139 = vmatmul.f32.gmra.mxu0 %v76
  %v140 = vpop.f32.mrf.mxu0
  %v141 = vadd.f32 %v33, %v140
  %142 = vmatmul.f32.gmra.mxu0 %v79
  %v143 = vpop.f32.mrf.mxu0
  %v144 = vadd.f32 %v33, %v143
  %145 = vmatmul.f32.gmra.mxu0 %v82
  %v146 = vpop.f32.mrf.mxu0
  %v147 = vadd.f32 %v33, %v146
  %148 = vdwg.mxu0
  %vm149 = vcmask 523264
  %150 = vst.msk [vmem:[%s3] sm:$0xff] %vm149, %v102
  %151 = vst.msk [vmem:[%s3 + $0x8] sm:$0xff] %vm149, %v105
  %152 = vst.msk [vmem:[%s3 + $0x10] sm:$0xff] %vm149, %v108
  %153 = vst.msk [vmem:[%s3 + $0x18] sm:$0xff] %vm149, %v111
  %154 = vst.msk [vmem:[%s3 + $0x20] sm:$0xff] %vm149, %v114
  %155 = vst.msk [vmem:[%s3 + $0x28] sm:$0xff] %vm149, %v117
  %156 = vst.msk [vmem:[%s3 + $0x30] sm:$0xff] %vm149, %v120
  %157 = vst.msk [vmem:[%s3 + $0x38] sm:$0xff] %vm149, %v123
  %158 = vst.msk [vmem:[%s3 + $0x40] sm:$0xff] %vm149, %v126
  %159 = vst.msk [vmem:[%s3 + $0x48] sm:$0xff] %vm149, %v129
  %160 = vst.msk [vmem:[%s3 + $0x50] sm:$0xff] %vm149, %v132
  %161 = vst.msk [vmem:[%s3 + $0x58] sm:$0xff] %vm149, %v135
  %162 = vst.msk [vmem:[%s3 + $0x60] sm:$0xff] %vm149, %v138
  %163 = vst.msk [vmem:[%s3 + $0x68] sm:$0xff] %vm149, %v141
  %164 = vst.msk [vmem:[%s3 + $0x70] sm:$0xff] %vm149, %v144
  %165 = vst.msk [vmem:[%s3 + $0x78] sm:$0xff] %vm149, %v147
  // Predicated region
  $region14: #{tpu_custom_call.1} parent=0 // pred_check
    _
  $region15: #{tpu_custom_call.1} parent=0 // pred_check_branch
    %167 = sbr.rel (0) target = $region17
  $region16: #{tpu_custom_call.1} parent=0 // pred_region
    _
  $region17: #{tpu_custom_call.1} parent=0 // pred_fallthru
    _
  // Predicated region
  $region18: #{tpu_custom_call.1} parent=0 // pred_check
    _
  $region19: #{tpu_custom_call.1} parent=0 // pred_check_branch
    %169 = sbr.rel (0) target = $region21
  $region20: #{tpu_custom_call.1} parent=0 // pred_region
    _
  $region21: #{tpu_custom_call.1} parent=0 // pred_fallthru
    _

</llo_original>
